<compile_context>
chip_gen: v7x
topology: tpu7x:2x2x1
jax: 0.10.0
libtpu: 0.0.40
codegen_flags: <defaults>
</compile_context>

<pallas_src>
import functools

import jax
import jax.numpy as jnp
from jax import lax
from jax.experimental import pallas as pl
from jax.experimental.pallas import tpu as pltpu


def _mlp_kernel(xT_ref, w1_ref, b1_ref, w2_ref, b2_ref, w3_ref, b3_ref, oT_ref):
    tn = xT_ref.shape[1]                   # batch_tile (static, multiple of 128)
    chunk = min(512, tn)                   # sub-chunk to bound vreg pressure
    n_chunks = tn // chunk                 # batch_tile chosen so this divides evenly

    # Constants loaded once per grid step (hoisted out of the chunk loop).
    w1 = w1_ref[...]                       # (64, 2)
    w1a, w1b = w1[:, 0:1], w1[:, 1:2]      # (64, 1) each
    b1 = b1_ref[...]                       # (64, 1)
    w2 = w2_ref[...]                       # (64, 64)
    b2 = b2_ref[...]                       # (64, 1)
    w3 = w3_ref[...]                       # (2, 64)
    b3 = b3_ref[...]                       # (2, 1)

    def compute_chunk(off):
        xT = xT_ref[:, pl.ds(off, chunk)].astype(jnp.float32)     # (2, chunk)

        # Layer 1: K=2 contraction -> VPU broadcast-FMAs (MXU would be wasted).
        h1 = jnp.maximum(w1a * xT[0:1, :] + w1b * xT[1:2, :] + b1, 0.0)  # (64, chunk)

        # Layer 2: 64x64 MXU matmul, lane-dense (64, chunk) result.
        h2 = jnp.maximum(
            jnp.dot(w2, h1, preferred_element_type=jnp.float32) + b2, 0.0)

        # Layer 3: (2,64)@(64,chunk) -> lane-dense (2, chunk), unmasked stores.
        out = jnp.dot(w3, h2, preferred_element_type=jnp.float32) + b3
        oT_ref[:, pl.ds(off, chunk)] = out.astype(oT_ref.dtype)

    if n_chunks == 1:
        compute_chunk(0)
    else:
        def body(c, carry):
            compute_chunk(pl.multiple_of(c * chunk, 128))
            return carry
        lax.fori_loop(0, n_chunks, body, None, unroll=2)


def _pick_batch_tile(n):
    """Pick a lane-dense tile: big enough to amortize step overhead, grid >= 2
    for larger batches (v7x megacore), capped at 2048 lanes."""
    lanes = max(128, pl.cdiv(n, 128) * 128)
    if lanes <= 512:
        return lanes                       # one small step; nothing to amortize
    # Aim for >= 2 grid steps, 512-lane granularity so the in-kernel chunk loop
    # divides evenly, capped at 2048 lanes.
    half = pl.cdiv(lanes, 2 * 512) * 512
    return int(min(2048, half))


@functools.partial(jax.jit, static_argnames=("batch_tile",))
def correction_net_forward(xy, params, batch_tile=None):
    """xy: (N, 2) float32.  Returns (N, 2) float32."""
    w1, b1, w2, b2, w3, b3 = params        # PyTorch layout: W (out, in), b (out,)
    n, d_in = xy.shape
    d_h = w1.shape[0]
    d_out = w3.shape[0]

    if batch_tile is None:
        batch_tile = _pick_batch_tile(n)
    assert batch_tile % 128 == 0, "batch_tile must be a multiple of 128 lanes"

    # Pad the batch up to a tile multiple (single fused pad, zeros flow through
    # to bias-only outputs that are sliced off), then go lane-dense: (2, n_pad).
    n_pad = pl.cdiv(n, batch_tile) * batch_tile
    xT = jnp.pad(xy, ((0, n_pad - n), (0, 0))).T

    grid = (n_pad // batch_tile,)

    # Weights / biases are tiny: each is one whole block that stays resident
    # across the batch grid loop (index_map always returns block 0).
    def const_spec(shape):
        return pl.BlockSpec(shape, lambda i: tuple(0 for _ in shape))

    outT = pl.pallas_call(
        _mlp_kernel,
        out_shape=jax.ShapeDtypeStruct((d_out, n_pad), xy.dtype),
        grid_spec=pl.GridSpec(
            grid=grid,
            in_specs=[
                pl.BlockSpec((d_in, batch_tile), lambda i: (0, i)),   # x^T tile
                const_spec((d_h, d_in)),    # W1 (64, 2)
                const_spec((d_h, 1)),       # b1 (64, 1)
                const_spec((d_h, d_h)),     # W2 (64, 64)
                const_spec((d_h, 1)),       # b2 (64, 1)
                const_spec((d_out, d_h)),   # W3 (2, 64)
                const_spec((d_out, 1)),     # b3 (2, 1)
            ],
            out_specs=pl.BlockSpec((d_out, batch_tile), lambda i: (0, i)),
        ),
        compiler_params=pltpu.CompilerParams(
            dimension_semantics=("parallel",),   # megacore sharding on v7x when grid >= 2
        ),
    )(xT, w1, b1.reshape(d_h, 1), w2, b2.reshape(d_h, 1), w3, b3.reshape(d_out, 1))

    return outT[:, :n].T


def init_params(key):
    """Deterministic init mimicking nn.Linear's U(-1/sqrt(fan_in), 1/sqrt(fan_in)).

    Weights are stored in the PyTorch convention W: (out_features, in_features),
    biases as (out_features,).
    """
    dims = [(2, 64), (64, 64), (64, 2)]
    params = []
    keys = jax.random.split(key, 2 * len(dims))
    for li, (fan_in, fan_out) in enumerate(dims):
        bound = 1.0 / jnp.sqrt(jnp.asarray(fan_in, jnp.float32))
        w = jax.random.uniform(keys[2 * li], (fan_out, fan_in), jnp.float32,
                               minval=-bound, maxval=bound)
        b = jax.random.uniform(keys[2 * li + 1], (fan_out,), jnp.float32,
                               minval=-bound, maxval=bound)
        params += [w, b]
    return tuple(params)


def reference_forward(xy, params):
    w1, b1, w2, b2, w3, b3 = params
    h1 = jnp.maximum(xy @ w1.T + b1, 0.0)
    h2 = jnp.maximum(h1 @ w2.T + b2, 0.0)
    return h2 @ w3.T + b3


if __name__ == "__main__":
    key = jax.random.PRNGKey(0)
    pkey, xkey1, xkey2 = jax.random.split(key, 3)

    params = init_params(pkey)

    # Small batch (exercises padding + single-chunk path, grid = 1).
    xy_small = jax.random.normal(xkey1, (16, 2), jnp.float32)
    out_small = jax.block_until_ready(correction_net_forward(xy_small, params))
    ref_small = reference_forward(xy_small, params)
    assert out_small.shape == (16, 2)
    assert jnp.allclose(out_small, ref_small, atol=1e-4, rtol=1e-4), "mismatch (small)"

    # Larger batch: auto tile = 512 lanes -> grid = 2 parallel steps
    # (both v7x TensorCores engaged), single 512-lane chunk per step.
    xy_big = jax.random.normal(xkey2, (1024, 2), jnp.float32)
    out_big = jax.block_until_ready(correction_net_forward(xy_big, params))
    ref_big = reference_forward(xy_big, params)
    assert out_big.shape == (1024, 2)
    assert jnp.allclose(out_big, ref_big, atol=1e-4, rtol=1e-4), "mismatch (big)"

    # Explicit large tile (2048 lanes, multi-chunk inner loop, unroll=2).
    xy_huge = jax.random.normal(xkey2, (4096, 2), jnp.float32)
    out_huge = jax.block_until_ready(
        correction_net_forward(xy_huge, params, batch_tile=2048))
    ref_huge = reference_forward(xy_huge, params)
    assert out_huge.shape == (4096, 2)
    assert jnp.allclose(out_huge, ref_huge, atol=1e-4, rtol=1e-4), "mismatch (huge)"

    print("KERNEL_OK")
</pallas_src>

<mosaic_0001>
module attributes {stable_mosaic.version = 11 : i64} {
  func.func @_mlp_kernel(%arg0: i32, %arg1: memref<2x128xf32, #tpu.memory_space<vmem>>, %arg2: memref<64x2xf32, #tpu.memory_space<vmem>>, %arg3: memref<64x1xf32, #tpu.memory_space<vmem>>, %arg4: memref<64x64xf32, #tpu.memory_space<vmem>>, %arg5: memref<64x1xf32, #tpu.memory_space<vmem>>, %arg6: memref<2x64xf32, #tpu.memory_space<vmem>>, %arg7: memref<2x1xf32, #tpu.memory_space<vmem>>, %arg8: memref<2x128xf32, #tpu.memory_space<vmem>>) attributes {dimension_semantics = [#tpu.dimension_semantics<parallel>], iteration_bounds = array<i64: 1>, scalar_prefetch = 0 : i64, scratch_operands = 0 : i64, tpu.core_type = #tpu.core_type<tc>, window_params = [{transform_indices = @transform_0, window_bounds = array<i64: 2, 128>}, {pipeline_mode = #tpu.pipeline_mode<synchronous>, transform_indices = @transform_1, window_bounds = array<i64: 64, 2>}, {pipeline_mode = #tpu.pipeline_mode<synchronous>, transform_indices = @transform_2, window_bounds = array<i64: 64, 1>}, {pipeline_mode = #tpu.pipeline_mode<synchronous>, transform_indices = @transform_3, window_bounds = array<i64: 64, 64>}, {pipeline_mode = #tpu.pipeline_mode<synchronous>, transform_indices = @transform_4, window_bounds = array<i64: 64, 1>}, {pipeline_mode = #tpu.pipeline_mode<synchronous>, transform_indices = @transform_5, window_bounds = array<i64: 2, 64>}, {pipeline_mode = #tpu.pipeline_mode<synchronous>, transform_indices = @transform_6, window_bounds = array<i64: 2, 1>}, {transform_indices = @transform_7, window_bounds = array<i64: 2, 128>}]} {
    %c0 = arith.constant 0 : index
    %c0_0 = arith.constant 0 : index
    %0 = vector.load %arg2[%c0, %c0_0] : memref<64x2xf32, #tpu.memory_space<vmem>>, vector<64x2xf32>
    %1 = vector.extract_strided_slice %0 {offsets = [0, 0], sizes = [64, 1], strides = [1, 1]} : vector<64x2xf32> to vector<64x1xf32>
    %2 = vector.extract_strided_slice %0 {offsets = [0, 1], sizes = [64, 1], strides = [1, 1]} : vector<64x2xf32> to vector<64x1xf32>
    %c0_1 = arith.constant 0 : index
    %c0_2 = arith.constant 0 : index
    %3 = vector.load %arg3[%c0_1, %c0_2] : memref<64x1xf32, #tpu.memory_space<vmem>>, vector<64x1xf32>
    %c0_3 = arith.constant 0 : index
    %c0_4 = arith.constant 0 : index
    %4 = vector.load %arg4[%c0_3, %c0_4] : memref<64x64xf32, #tpu.memory_space<vmem>>, vector<64x64xf32>
    %c0_5 = arith.constant 0 : index
    %c0_6 = arith.constant 0 : index
    %5 = vector.load %arg5[%c0_5, %c0_6] : memref<64x1xf32, #tpu.memory_space<vmem>>, vector<64x1xf32>
    %c0_7 = arith.constant 0 : index
    %c0_8 = arith.constant 0 : index
    %6 = vector.load %arg6[%c0_7, %c0_8] : memref<2x64xf32, #tpu.memory_space<vmem>>, vector<2x64xf32>
    %c0_9 = arith.constant 0 : index
    %c0_10 = arith.constant 0 : index
    %7 = vector.load %arg7[%c0_9, %c0_10] : memref<2x1xf32, #tpu.memory_space<vmem>>, vector<2x1xf32>
    %c0_11 = arith.constant 0 : index
    %c0_12 = arith.constant 0 : index
    %8 = vector.load %arg1[%c0_11, %c0_12] : memref<2x128xf32, #tpu.memory_space<vmem>>, vector<2x128xf32>
    %9 = vector.extract_strided_slice %8 {offsets = [0, 0], sizes = [1, 128], strides = [1, 1]} : vector<2x128xf32> to vector<1x128xf32>
    %10 = vector.broadcast %1 : vector<64x1xf32> to vector<64x128xf32>
    %11 = vector.broadcast %9 : vector<1x128xf32> to vector<64x128xf32>
    %12 = arith.mulf %10, %11 : vector<64x128xf32>
    %13 = vector.extract_strided_slice %8 {offsets = [1, 0], sizes = [1, 128], strides = [1, 1]} : vector<2x128xf32> to vector<1x128xf32>
    %14 = vector.broadcast %2 : vector<64x1xf32> to vector<64x128xf32>
    %15 = vector.broadcast %13 : vector<1x128xf32> to vector<64x128xf32>
    %16 = arith.mulf %14, %15 : vector<64x128xf32>
    %17 = arith.addf %12, %16 : vector<64x128xf32>
    %18 = vector.broadcast %3 : vector<64x1xf32> to vector<64x128xf32>
    %19 = arith.addf %17, %18 : vector<64x128xf32>
    %cst = arith.constant 0.000000e+00 : f32
    %20 = vector.broadcast %cst : f32 to vector<64x128xf32>
    %21 = arith.maximumf %19, %20 : vector<64x128xf32>
    %cst_13 = arith.constant dense<0.000000e+00> : vector<64x128xf32>
    %22 = tpu.matmul %4, %21, %cst_13 {dimension_numbers = #tpu.dot_dimension_numbers<[1], [0], [0], [1], [0, 0, 1, 1], [], []>} : vector<64x64xf32>, vector<64x128xf32>, vector<64x128xf32> -> vector<64x128xf32>
    %23 = vector.broadcast %5 : vector<64x1xf32> to vector<64x128xf32>
    %24 = arith.addf %22, %23 : vector<64x128xf32>
    %cst_14 = arith.constant 0.000000e+00 : f32
    %25 = vector.broadcast %cst_14 : f32 to vector<64x128xf32>
    %26 = arith.maximumf %24, %25 : vector<64x128xf32>
    %cst_15 = arith.constant dense<0.000000e+00> : vector<2x128xf32>
    %27 = tpu.matmul %6, %26, %cst_15 {dimension_numbers = #tpu.dot_dimension_numbers<[1], [0], [0], [1], [0, 0, 1, 1], [], []>} : vector<2x64xf32>, vector<64x128xf32>, vector<2x128xf32> -> vector<2x128xf32>
    %28 = vector.broadcast %7 : vector<2x1xf32> to vector<2x128xf32>
    %29 = arith.addf %27, %28 : vector<2x128xf32>
    %c0_16 = arith.constant 0 : index
    %c0_17 = arith.constant 0 : index
    %30 = vector.load %arg8[%c0_16, %c0_17] : memref<2x128xf32, #tpu.memory_space<vmem>>, vector<2x128xf32>
    tpu.vector_store %arg8[%c0_16, %c0_17], %29 {strides = array<i32>} : memref<2x128xf32, #tpu.memory_space<vmem>>, vector<2x128xf32>,
    return
  }
  func.func @transform_0(%arg0: i32) -> (i32, i32) {
    %c0_i32 = arith.constant 0 : i32
    %c0_i32_0 = arith.constant 0 : i32
    return %c0_i32, %arg0 : i32, i32
  }
  func.func @transform_1(%arg0: i32) -> (i32, i32) {
    %c0_i32 = arith.constant 0 : i32
    %c0_i32_0 = arith.constant 0 : i32
    %c0_i32_1 = arith.constant 0 : i32
    return %c0_i32, %c0_i32_0 : i32, i32
  }
  func.func @transform_2(%arg0: i32) -> (i32, i32) {
    %c0_i32 = arith.constant 0 : i32
    %c0_i32_0 = arith.constant 0 : i32
    %c0_i32_1 = arith.constant 0 : i32
    return %c0_i32, %c0_i32_0 : i32, i32
  }
  func.func @transform_3(%arg0: i32) -> (i32, i32) {
    %c0_i32 = arith.constant 0 : i32
    %c0_i32_0 = arith.constant 0 : i32
    %c0_i32_1 = arith.constant 0 : i32
    return %c0_i32, %c0_i32_0 : i32, i32
  }
  func.func @transform_4(%arg0: i32) -> (i32, i32) {
    %c0_i32 = arith.constant 0 : i32
    %c0_i32_0 = arith.constant 0 : i32
    %c0_i32_1 = arith.constant 0 : i32
    return %c0_i32, %c0_i32_0 : i32, i32
  }
  func.func @transform_5(%arg0: i32) -> (i32, i32) {
    %c0_i32 = arith.constant 0 : i32
    %c0_i32_0 = arith.constant 0 : i32
    %c0_i32_1 = arith.constant 0 : i32
    return %c0_i32, %c0_i32_0 : i32, i32
  }
  func.func @transform_6(%arg0: i32) -> (i32, i32) {
    %c0_i32 = arith.constant 0 : i32
    %c0_i32_0 = arith.constant 0 : i32
    %c0_i32_1 = arith.constant 0 : i32
    return %c0_i32, %c0_i32_0 : i32, i32
  }
  func.func @transform_7(%arg0: i32) -> (i32, i32) {
    %c0_i32 = arith.constant 0 : i32
    %c0_i32_0 = arith.constant 0 : i32
    return %c0_i32, %arg0 : i32, i32
  }
}

</mosaic_0001>

<llo_original>
// kernel: correction_net_forward.1
$region0: #{correction_net_forward.1}
  #allocation0 [shape = 'u32[]', space=smem, size = 0x4, offset = 0x4, fixed_abs, tag = 'smem constant byte address 0x4 - core index']
  #allocation1 [shape = 'u32[144,128]{1,0:T(1,128)}', space=vmem, size = 0x12000, scoped, tag = 'internal scratch']
  %s0 = inlined_call_operand.vmem [shape: f32[2,128], index: 0, kind: input, shape index: {}]
  %s1 = inlined_call_operand.vmem [shape: f32[64,2], index: 1, kind: input, shape index: {}]
  %s2 = inlined_call_operand.vmem [shape: f32[64,1], index: 2, kind: input, shape index: {}]
  %s3 = inlined_call_operand.vmem [shape: f32[64,64], index: 3, kind: input, shape index: {}]
  %s4 = inlined_call_operand.vmem [shape: f32[64,1], index: 4, kind: input, shape index: {}]
  %s5 = inlined_call_operand.vmem [shape: f32[2,64], index: 5, kind: input, shape index: {}]
  %s6 = inlined_call_operand.vmem [shape: f32[2,1], index: 6, kind: input, shape index: {}]
  %s7 = inlined_call_operand.vmem [shape: f32[2,128], index: 7, kind: output, shape index: {}]
  %s8 = sld [smem:[#allocation0]]
  $region38: #{correction_net_forward.1} parent=0
    _
  %s10 = ssub.s32 1, %s8
  %s11 = scalar_select 0, %s10, %s8
  // Predicated region
  $region2: #{correction_net_forward.1} parent=0 // pred_check
    _
  $region3: #{correction_net_forward.1} parent=0 // pred_check_branch
    %13 = sbr.rel (0) target = $region5
  $region4: #{correction_net_forward.1} parent=0 // pred_region
    _
  $region5: #{correction_net_forward.1} parent=0 // pred_fallthru
    _
  // Predicated region
  $region6: #{correction_net_forward.1} parent=0 // pred_check
    _
  $region7: #{correction_net_forward.1} parent=0 // pred_check_branch
    %15 = sbr.rel (0) target = $region9
  $region8: #{correction_net_forward.1} parent=0 // pred_region
    _
  $region9: #{correction_net_forward.1} parent=0 // pred_fallthru
    _
  // Predicated region
  $region10: #{correction_net_forward.1} parent=0 // pred_check
    _
  $region11: #{correction_net_forward.1} parent=0 // pred_check_branch
    %17 = sbr.rel (0) target = $region13
  $region12: #{correction_net_forward.1} parent=0 // pred_region
    _
  $region13: #{correction_net_forward.1} parent=0 // pred_fallthru
    _
  // Predicated region
  $region14: #{correction_net_forward.1} parent=0 // pred_check
    _
  $region15: #{correction_net_forward.1} parent=0 // pred_check_branch
    %19 = sbr.rel (0) target = $region17
  $region16: #{correction_net_forward.1} parent=0 // pred_region
    _
  $region17: #{correction_net_forward.1} parent=0 // pred_fallthru
    _
  // Predicated region
  $region18: #{correction_net_forward.1} parent=0 // pred_check
    _
  $region19: #{correction_net_forward.1} parent=0 // pred_check_branch
    %21 = sbr.rel (0) target = $region21
  $region20: #{correction_net_forward.1} parent=0 // pred_region
    _
  $region21: #{correction_net_forward.1} parent=0 // pred_fallthru
    _
  // Predicated region
  $region22: #{correction_net_forward.1} parent=0 // pred_check
    _
  $region23: #{correction_net_forward.1} parent=0 // pred_check_branch
    %23 = sbr.rel (0) target = $region25
  $region24: #{correction_net_forward.1} parent=0 // pred_region
    _
  $region25: #{correction_net_forward.1} parent=0 // pred_fallthru
    _
  // Predicated region
  $region26: #{correction_net_forward.1} parent=0 // pred_check
    _
  $region27: #{correction_net_forward.1} parent=0 // pred_check_branch
    %25 = sbr.rel (0) target = $region29
  $region28: #{correction_net_forward.1} parent=0 // pred_region
    _
  $region29: #{correction_net_forward.1} parent=0 // pred_fallthru
    _
  %v26 = vld [vmem:[%s1] sm:$0xff]
  %v27 = vld [vmem:[%s1 + $0x8] sm:$0xff]
  %v28 = vld [vmem:[%s1 + $0x10] sm:$0xff]
  %v29 = vld [vmem:[%s1 + $0x18] sm:$0xff]
  %v30 = vld [vmem:[%s1 + $0x20] sm:$0xff]
  %v31 = vld [vmem:[%s1 + $0x28] sm:$0xff]
  %v32 = vld [vmem:[%s1 + $0x30] sm:$0xff]
  %v33 = vld [vmem:[%s1 + $0x38] sm:$0xff]
  %v34 = vld [vmem:[%s2] sm:$0xff]
  %v35 = vld [vmem:[%s2 + $0x8] sm:$0xff]
  %v36 = vld [vmem:[%s2 + $0x10] sm:$0xff]
  %v37 = vld [vmem:[%s2 + $0x18] sm:$0xff]
  %v38 = vld [vmem:[%s2 + $0x20] sm:$0xff]
  %v39 = vld [vmem:[%s2 + $0x28] sm:$0xff]
  %v40 = vld [vmem:[%s2 + $0x30] sm:$0xff]
  %v41 = vld [vmem:[%s2 + $0x38] sm:$0xff]
  %v42 = vld [vmem:[%s3] sm:$0xff]
  %v43 = vld [vmem:[%s3 + $0x8] sm:$0xff]
  %v44 = vld [vmem:[%s3 + $0x10] sm:$0xff]
  %v45 = vld [vmem:[%s3 + $0x18] sm:$0xff]
  %v46 = vld [vmem:[%s3 + $0x20] sm:$0xff]
  %v47 = vld [vmem:[%s3 + $0x28] sm:$0xff]
  %v48 = vld [vmem:[%s3 + $0x30] sm:$0xff]
  %v49 = vld [vmem:[%s3 + $0x38] sm:$0xff]
  %v50 = vld [vmem:[%s4] sm:$0xff]
  %v51 = vld [vmem:[%s4 + $0x8] sm:$0xff]
  %v52 = vld [vmem:[%s4 + $0x10] sm:$0xff]
  %v53 = vld [vmem:[%s4 + $0x18] sm:$0xff]
  %v54 = vld [vmem:[%s4 + $0x20] sm:$0xff]
  %v55 = vld [vmem:[%s4 + $0x28] sm:$0xff]
  %v56 = vld [vmem:[%s4 + $0x30] sm:$0xff]
  %v57 = vld [vmem:[%s4 + $0x38] sm:$0xff]
  %v58 = vld [vmem:[%s5] sm:$0x3]
  %v59 = vld [vmem:[%s6] sm:$0x3]
  %v60 = vld [vmem:[%s0] sm:$0x3]
  %62 = vset.pattern.permute.xlu0 0
  %63 = vperm.xlu0 %62, %v26
  %v64 = vpop.permute.xlu0 %63
  %67 = vset.pattern.permute.xlu0 0
  %68 = vperm.xlu0 %67, %v27
  %v69 = vpop.permute.xlu0 %68
  %72 = vset.pattern.permute.xlu0 0
  %73 = vperm.xlu0 %72, %v28
  %v74 = vpop.permute.xlu0 %73
  %77 = vset.pattern.permute.xlu0 0
  %78 = vperm.xlu0 %77, %v29
  %v79 = vpop.permute.xlu0 %78
  %82 = vset.pattern.permute.xlu0 0
  %83 = vperm.xlu0 %82, %v30
  %v84 = vpop.permute.xlu0 %83
  %87 = vset.pattern.permute.xlu0 0
  %88 = vperm.xlu0 %87, %v31
  %v89 = vpop.permute.xlu0 %88
  %92 = vset.pattern.permute.xlu0 0
  %93 = vperm.xlu0 %92, %v32
  %v94 = vpop.permute.xlu0 %93
  %97 = vset.pattern.permute.xlu0 0
  %98 = vperm.xlu0 %97, %v33
  %v99 = vpop.permute.xlu0 %98
  %v101 = vlaneseq
  %v102 = vshrl.u32 %v101, 7
  %v103 = vsub.s32 0, %v102
  %v104 = vrot.slane %v60, %v103
  %v105 = vmul.f32 %v64, %v104
  %v106 = vmul.f32 %v69, %v104
  %v107 = vmul.f32 %v74, %v104
  %v108 = vmul.f32 %v79, %v104
  %v109 = vmul.f32 %v84, %v104
  %v110 = vmul.f32 %v89, %v104
  %v111 = vmul.f32 %v94, %v104
  %v112 = vmul.f32 %v99, %v104
  %113 = vset.pattern.permute.xlu0 1
  %114 = vperm.xlu0 %113, %v26
  %v115 = vpop.permute.xlu0 %114
  %117 = vset.pattern.permute.xlu0 1
  %118 = vperm.xlu0 %117, %v27
  %v119 = vpop.permute.xlu0 %118
  %121 = vset.pattern.permute.xlu0 1
  %122 = vperm.xlu0 %121, %v28
  %v123 = vpop.permute.xlu0 %122
  %125 = vset.pattern.permute.xlu0 1
  %126 = vperm.xlu0 %125, %v29
  %v127 = vpop.permute.xlu0 %126
  %129 = vset.pattern.permute.xlu0 1
  %130 = vperm.xlu0 %129, %v30
  %v131 = vpop.permute.xlu0 %130
  %133 = vset.pattern.permute.xlu0 1
  %134 = vperm.xlu0 %133, %v31
  %v135 = vpop.permute.xlu0 %134
  %137 = vset.pattern.permute.xlu0 1
  %138 = vperm.xlu0 %137, %v32
  %v139 = vpop.permute.xlu0 %138
  %141 = vset.pattern.permute.xlu0 1
  %142 = vperm.xlu0 %141, %v33
  %v143 = vpop.permute.xlu0 %142
  %v145 = vlaneseq
  %v146 = vshrl.u32 %v145, 7
  %v147 = vsub.s32 1, %v146
  %v148 = vrot.slane %v60, %v147
  %v149 = vmul.f32 %v115, %v148
  %v150 = vmul.f32 %v119, %v148
  %v151 = vmul.f32 %v123, %v148
  %v152 = vmul.f32 %v127, %v148
  %v153 = vmul.f32 %v131, %v148
  %v154 = vmul.f32 %v135, %v148
  %v155 = vmul.f32 %v139, %v148
  %v156 = vmul.f32 %v143, %v148
  %v157 = vadd.f32 %v105, %v149
  %v158 = vadd.f32 %v106, %v150
  %v159 = vadd.f32 %v107, %v151
  %v160 = vadd.f32 %v108, %v152
  %v161 = vadd.f32 %v109, %v153
  %v162 = vadd.f32 %v110, %v154
  %v163 = vadd.f32 %v111, %v155
  %v164 = vadd.f32 %v112, %v156
  %166 = vset.pattern.permute.xlu0 0
  %167 = vperm.xlu0 %166, %v34
  %v168 = vpop.permute.xlu0 %167
  %171 = vset.pattern.permute.xlu0 0
  %172 = vperm.xlu0 %171, %v35
  %v173 = vpop.permute.xlu0 %172
  %176 = vset.pattern.permute.xlu0 0
  %177 = vperm.xlu0 %176, %v36
  %v178 = vpop.permute.xlu0 %177
  %181 = vset.pattern.permute.xlu0 0
  %182 = vperm.xlu0 %181, %v37
  %v183 = vpop.permute.xlu0 %182
  %186 = vset.pattern.permute.xlu0 0
  %187 = vperm.xlu0 %186, %v38
  %v188 = vpop.permute.xlu0 %187
  %191 = vset.pattern.permute.xlu0 0
  %192 = vperm.xlu0 %191, %v39
  %v193 = vpop.permute.xlu0 %192
  %196 = vset.pattern.permute.xlu0 0
  %197 = vperm.xlu0 %196, %v40
  %v198 = vpop.permute.xlu0 %197
  %201 = vset.pattern.permute.xlu0 0
  %202 = vperm.xlu0 %201, %v41
  %v203 = vpop.permute.xlu0 %202
  %v205 = vadd.f32 %v157, %v168
  %v206 = vadd.f32 %v158, %v173
  %v207 = vadd.f32 %v159, %v178
  %v208 = vadd.f32 %v160, %v183
  %v209 = vadd.f32 %v161, %v188
  %v210 = vadd.f32 %v162, %v193
  %v211 = vadd.f32 %v163, %v198
  %v212 = vadd.f32 %v164, %v203
  %v213 = vmax.f32 %v205, 0.0
  %v214 = vmax.f32 %v206, 0.0
  %v215 = vmax.f32 %v207, 0.0
  %v216 = vmax.f32 %v208, 0.0
  %v217 = vmax.f32 %v209, 0.0
  %v218 = vmax.f32 %v210, 0.0
  %v219 = vmax.f32 %v211, 0.0
  %v220 = vmax.f32 %v212, 0.0
  %222 = vset.pattern.permute.xlu0 0
  %223 = vperm.xlu0 %222, %v50
  %v224 = vpop.permute.xlu0 %223
  %227 = vset.pattern.permute.xlu0 0
  %228 = vperm.xlu0 %227, %v51
  %v229 = vpop.permute.xlu0 %228
  %232 = vset.pattern.permute.xlu0 0
  %233 = vperm.xlu0 %232, %v52
  %v234 = vpop.permute.xlu0 %233
  %237 = vset.pattern.permute.xlu0 0
  %238 = vperm.xlu0 %237, %v53
  %v239 = vpop.permute.xlu0 %238
  %242 = vset.pattern.permute.xlu0 0
  %243 = vperm.xlu0 %242, %v54
  %v244 = vpop.permute.xlu0 %243
  %247 = vset.pattern.permute.xlu0 0
  %248 = vperm.xlu0 %247, %v55
  %v249 = vpop.permute.xlu0 %248
  %252 = vset.pattern.permute.xlu0 0
  %253 = vperm.xlu0 %252, %v56
  %v254 = vpop.permute.xlu0 %253
  %257 = vset.pattern.permute.xlu0 0
  %258 = vperm.xlu0 %257, %v57
  %v259 = vpop.permute.xlu0 %258
  %vm261 = vcmask 523264
  %v263 = vsel %vm261, %v42, 0
  %v266 = vsel %vm261, %v43, 0
  %v269 = vsel %vm261, %v44, 0
  %v272 = vsel %vm261, %v45, 0
  %v275 = vsel %vm261, %v46, 0
  %v278 = vsel %vm261, %v47, 0
  %v281 = vsel %vm261, %v48, 0
  %v284 = vsel %vm261, %v49, 0
  %286 = vmatprep.subr.mxu0 0.0
  %287 = vmatpush1.msra.mxu0 %v213
  %288 = vmatprep.subr.mxu0 0.0
  %289 = vmatpush1.msra.mxu0 %v214
  %290 = vmatprep.subr.mxu0 0.0
  %291 = vmatpush1.msra.mxu0 %v215
  %292 = vmatprep.subr.mxu0 0.0
  %293 = vmatpush1.msra.mxu0 %v216
  %294 = vmatprep.subr.mxu0 0.0
  %295 = vmatpush1.msra.mxu0 %v217
  %296 = vmatprep.subr.mxu0 0.0
  %297 = vmatpush1.msra.mxu0 %v218
  %298 = vmatprep.subr.mxu0 0.0
  %299 = vmatpush1.msra.mxu0 %v219
  %300 = vmatprep.subr.mxu0 0.0
  %301 = vmatpush1.msra.mxu0 %v220
  %302 = vmatprep.subr.mxu0 0.0
  %303 = vmatpush1.msra.mxu0 0.0
  %304 = vmatprep.subr.mxu0 0.0
  %305 = vmatpush1.msra.mxu0 0.0
  %306 = vmatprep.subr.mxu0 0.0
  %307 = vmatpush1.msra.mxu0 0.0
  %308 = vmatprep.subr.mxu0 0.0
  %309 = vmatpush1.msra.mxu0 0.0
  %310 = vmatprep.subr.mxu0 0.0
  %311 = vmatpush1.msra.mxu0 0.0
  %312 = vmatprep.subr.mxu0 0.0
  %313 = vmatpush1.msra.mxu0 0.0
  %314 = vmatprep.subr.mxu0 0.0
  %315 = vmatpush1.msra.mxu0 0.0
  %316 = vmatprep.subr.mxu0 0.0
  %317 = vmatpush1.msra.mxu0 0.0
  %318 = vmatprep.subr.mxu0 0.0
  %319 = vmatpush1.msra.mxu0 0.0
  %320 = vmatprep.subr.mxu0 0.0
  %321 = vmatpush1.msra.mxu0 0.0
  %322 = vmatprep.subr.mxu0 0.0
  %323 = vmatpush1.msra.mxu0 0.0
  %324 = vmatprep.subr.mxu0 0.0
  %325 = vmatpush1.msra.mxu0 0.0
  %326 = vmatprep.subr.mxu0 0.0
  %327 = vmatpush1.msra.mxu0 0.0
  %328 = vmatprep.subr.mxu0 0.0
  %329 = vmatpush1.msra.mxu0 0.0
  %330 = vmatprep.subr.mxu0 0.0
  %331 = vmatpush1.msra.mxu0 0.0
  %332 = vmatprep.subr.mxu0 0.0
  %333 = vmatpush1.msra.mxu0 0.0
  %334 = vmatprep.subr.mxu0 0.0
  %335 = vmatpush1.msra.mxu0 0.0
  %336 = vmatprep.subr.mxu0 0.0
  %337 = vmatpush1.msra.mxu0 0.0
  %338 = vmatprep.subr.mxu0 0.0
  %339 = vmatpush1.msra.mxu0 0.0
  %340 = vmatprep.subr.mxu0 0.0
  %341 = vmatpush1.msra.mxu0 0.0
  %342 = vmatprep.subr.mxu0 0.0
  %343 = vmatpush1.msra.mxu0 0.0
  %344 = vmatprep.subr.mxu0 0.0
  %345 = vmatpush1.msra.mxu0 0.0
  %346 = vmatprep.subr.mxu0 0.0
  %347 = vmatpush1.msra.mxu0 0.0
  %348 = vmatprep.subr.mxu0 0.0
  %349 = vmatpush1.msra.mxu0 0.0
  %350 = vmatprep.mubr.f32.mxu0 0.0
  %351 = vmatmul.mubr.f32.gmra.mrb[0].mxu0 %v263
  %v352 = vpop.f32.mrb[0].mxu0
  %v353 = vadd.f32 %v224, %v352
  %v354 = vpop.f32.mrb[0].mxu0
  %355 = vmatprep.mubr.f32.mxu0 0.0
  %356 = vmatmul.mubr.f32.gmra.mrb[0].mxu0 %v266
  %v357 = vpop.f32.mrb[0].mxu0
  %v358 = vadd.f32 %v229, %v357
  %v359 = vpop.f32.mrb[0].mxu0
  %360 = vmatprep.mubr.f32.mxu0 0.0
  %361 = vmatmul.mubr.f32.gmra.mrb[0].mxu0 %v269
  %v362 = vpop.f32.mrb[0].mxu0
  %v363 = vadd.f32 %v234, %v362
  %v364 = vpop.f32.mrb[0].mxu0
  %365 = vmatprep.mubr.f32.mxu0 0.0
  %366 = vmatmul.mubr.f32.gmra.mrb[0].mxu0 %v272
  %v367 = vpop.f32.mrb[0].mxu0
  %v368 = vadd.f32 %v239, %v367
  %v369 = vpop.f32.mrb[0].mxu0
  %370 = vmatprep.mubr.f32.mxu0 0.0
  %371 = vmatmul.mubr.f32.gmra.mrb[0].mxu0 %v275
  %v372 = vpop.f32.mrb[0].mxu0
  %v373 = vadd.f32 %v244, %v372
  %v374 = vpop.f32.mrb[0].mxu0
  %375 = vmatprep.mubr.f32.mxu0 0.0
  %376 = vmatmul.mubr.f32.gmra.mrb[0].mxu0 %v278
  %v377 = vpop.f32.mrb[0].mxu0
  %v378 = vadd.f32 %v249, %v377
  %v379 = vpop.f32.mrb[0].mxu0
  %380 = vmatprep.mubr.f32.mxu0 0.0
  %381 = vmatmul.mubr.f32.gmra.mrb[0].mxu0 %v281
  %v382 = vpop.f32.mrb[0].mxu0
  %v383 = vadd.f32 %v254, %v382
  %v384 = vpop.f32.mrb[0].mxu0
  %385 = vmatprep.mubr.f32.mxu0 0.0
  %386 = vmatmul.mubr.f32.gmra.mrb[0].mxu0 %v284
  %v387 = vpop.f32.mrb[0].mxu0
  %v388 = vadd.f32 %v259, %v387
  %v389 = vpop.f32.mrb[0].mxu0
  %390 = vdwg.mxu0
  %v391 = vmax.f32 %v353, 0.0
  %v392 = vmax.f32 %v358, 0.0
  %v393 = vmax.f32 %v363, 0.0
  %v394 = vmax.f32 %v368, 0.0
  %v395 = vmax.f32 %v373, 0.0
  %v396 = vmax.f32 %v378, 0.0
  %v397 = vmax.f32 %v383, 0.0
  %v398 = vmax.f32 %v388, 0.0
  %400 = vset.pattern.permute.xlu0 0
  %401 = vperm.xlu0 %400, %v59
  %v402 = vpop.permute.xlu0 %401
  %v405 = vsel %vm261, %v58, 0
  %407 = vmatprep.subr.mxu0 0.0
  %408 = vmatpush1.msra.mxu0 %v391
  %409 = vmatprep.subr.mxu0 0.0
  %410 = vmatpush1.msra.mxu0 %v392
  %411 = vmatprep.subr.mxu0 0.0
  %412 = vmatpush1.msra.mxu0 %v393
  %413 = vmatprep.subr.mxu0 0.0
  %414 = vmatpush1.msra.mxu0 %v394
  %415 = vmatprep.subr.mxu0 0.0
  %416 = vmatpush1.msra.mxu0 %v395
  %417 = vmatprep.subr.mxu0 0.0
  %418 = vmatpush1.msra.mxu0 %v396
  %419 = vmatprep.subr.mxu0 0.0
  %420 = vmatpush1.msra.mxu0 %v397
  %421 = vmatprep.subr.mxu0 0.0
  %422 = vmatpush1.msra.mxu0 %v398
  %423 = vmatprep.subr.mxu0 0.0
  %424 = vmatpush1.msra.mxu0 0.0
  %425 = vmatprep.subr.mxu0 0.0
  %426 = vmatpush1.msra.mxu0 0.0
  %427 = vmatprep.subr.mxu0 0.0
  %428 = vmatpush1.msra.mxu0 0.0
  %429 = vmatprep.subr.mxu0 0.0
  %430 = vmatpush1.msra.mxu0 0.0
  %431 = vmatprep.subr.mxu0 0.0
  %432 = vmatpush1.msra.mxu0 0.0
  %433 = vmatprep.subr.mxu0 0.0
  %434 = vmatpush1.msra.mxu0 0.0
  %435 = vmatprep.subr.mxu0 0.0
  %436 = vmatpush1.msra.mxu0 0.0
  %437 = vmatprep.subr.mxu0 0.0
  %438 = vmatpush1.msra.mxu0 0.0
  %439 = vmatprep.subr.mxu0 0.0
  %440 = vmatpush1.msra.mxu0 0.0
  %441 = vmatprep.subr.mxu0 0.0
  %442 = vmatpush1.msra.mxu0 0.0
  %443 = vmatprep.subr.mxu0 0.0
  %444 = vmatpush1.msra.mxu0 0.0
  %445 = vmatprep.subr.mxu0 0.0
  %446 = vmatpush1.msra.mxu0 0.0
  %447 = vmatprep.subr.mxu0 0.0
  %448 = vmatpush1.msra.mxu0 0.0
  %449 = vmatprep.subr.mxu0 0.0
  %450 = vmatpush1.msra.mxu0 0.0
  %451 = vmatprep.subr.mxu0 0.0
  %452 = vmatpush1.msra.mxu0 0.0
  %453 = vmatprep.subr.mxu0 0.0
  %454 = vmatpush1.msra.mxu0 0.0
  %455 = vmatprep.subr.mxu0 0.0
  %456 = vmatpush1.msra.mxu0 0.0
  %457 = vmatprep.subr.mxu0 0.0
  %458 = vmatpush1.msra.mxu0 0.0
  %459 = vmatprep.subr.mxu0 0.0
  %460 = vmatpush1.msra.mxu0 0.0
  %461 = vmatprep.subr.mxu0 0.0
  %462 = vmatpush1.msra.mxu0 0.0
  %463 = vmatprep.subr.mxu0 0.0
  %464 = vmatpush1.msra.mxu0 0.0
  %465 = vmatprep.subr.mxu0 0.0
  %466 = vmatpush1.msra.mxu0 0.0
  %467 = vmatprep.subr.mxu0 0.0
  %468 = vmatpush1.msra.mxu0 0.0
  %469 = vmatprep.subr.mxu0 0.0
  %470 = vmatpush1.msra.mxu0 0.0
  %471 = vmatprep.mubr.f32.mxu0 0.0
  %472 = vmatmul.mubr.f32.gmra.mrb[0].mxu0 %v405
  %v473 = vpop.f32.mrb[0].mxu0
  %v474 = vadd.f32 %v402, %v473
  %v475 = vpop.f32.mrb[0].mxu0
  %476 = vdwg.mxu0
  %477 = vst [vmem:[%s7] sm:$0x3] %v474
  // Predicated region
  $region30: #{correction_net_forward.1} parent=0 // pred_check
    _
  $region31: #{correction_net_forward.1} parent=0 // pred_check_branch
    %479 = sbr.rel (0) target = $region33
  $region32: #{correction_net_forward.1} parent=0 // pred_region
    _
  $region33: #{correction_net_forward.1} parent=0 // pred_fallthru
    _
  // Predicated region
  $region34: #{correction_net_forward.1} parent=0 // pred_check
    _
  $region35: #{correction_net_forward.1} parent=0 // pred_check_branch
    %481 = sbr.rel (0) target = $region37
  $region36: #{correction_net_forward.1} parent=0 // pred_region
    _
  $region37: #{correction_net_forward.1} parent=0 // pred_fallthru
    _

</llo_original>
